<compile_context>
chip_gen: v7x
topology: tpu7x:2x2x1
jax: 0.10.0
libtpu: 0.0.40
codegen_flags: <defaults>
</compile_context>

<pallas_src>
import jax
import jax.numpy as jnp
import numpy as np
from jax.experimental import pallas as pl
from jax.experimental.pallas import tpu as pltpu

_MAX_BLOCK_BYTES = 4 * 1024 * 1024    # 4 MiB/block -> <=16 MiB with double-buffered in+out
_VMEM_LIMIT_BYTES = 32 * 1024 * 1024  # raises v5e's 16 MiB default; headroom on v7x (64 MiB phys)


def _identity_kernel(x_ref, o_ref):
    # TODO(synk): BaseModel.forward is abstract; concrete subclasses put their
    # real compute here. Identity is the only semantics-preserving op.
    o_ref[...] = x_ref[...]


def _sublane_multiple(dtype) -> int:
    # Sub-32-bit dtypes pack along sublanes: f32 -> 8, bf16 -> 16, int8/fp8 -> 32.
    itemsize = jnp.dtype(dtype).itemsize
    return 8 * max(1, 4 // itemsize)


def base_model_forward(x: jax.Array) -> jax.Array:
    """Identity forward for the abstract BaseModel, run through a Pallas kernel.

    NCHW input is flattened to a 2-D (N, C*H*W) slab so the channel/spatial
    product sits on the lane (last) axis and blocks stay lane-dense.
    """
    orig_shape = x.shape
    n = orig_shape[0] if len(orig_shape) > 0 else 1
    flat = x.reshape(max(n, 1), -1)              # (rows, cols), cols = lane axis
    rows, cols = flat.shape
    itemsize = jnp.dtype(x.dtype).itemsize
    total_bytes = rows * cols * itemsize
    sub = _sublane_multiple(x.dtype)

    common = dict(
        out_shape=jax.ShapeDtypeStruct((rows, cols), flat.dtype),
        input_output_aliases={0: 0},             # identity: write back into the input buffer
    )

    if total_bytes <= _MAX_BLOCK_BYTES:
        # Small arrays (the demo case): one grid step, full-extent blocks
        # (exempt from (8,128) divisibility) -> no padding, no slicing.
        out = pl.pallas_call(
            _identity_kernel,
            grid=(1,),
            in_specs=[pl.BlockSpec((rows, cols), lambda i: (0, 0))],
            out_specs=pl.BlockSpec((rows, cols), lambda i: (0, 0)),
            compiler_params=pltpu.CompilerParams(
                dimension_semantics=("arbitrary",),
                vmem_limit_bytes=_VMEM_LIMIT_BYTES,
            ),
            **common,
        )(flat)
    elif cols * itemsize * sub <= _MAX_BLOCK_BYTES:
        # Full lane-dense width per block; tile only the row axis.  Row block is
        # a sublane multiple; ragged last block is masked by Pallas (no pad).
        block_rows = max(sub, (_MAX_BLOCK_BYTES // (cols * itemsize)) // sub * sub)
        out = pl.pallas_call(
            _identity_kernel,
            grid=(pl.cdiv(rows, block_rows),),
            in_specs=[pl.BlockSpec((block_rows, cols), lambda i: (i, 0))],
            out_specs=pl.BlockSpec((block_rows, cols), lambda i: (i, 0)),
            compiler_params=pltpu.CompilerParams(
                dimension_semantics=("parallel",),
                vmem_limit_bytes=_VMEM_LIMIT_BYTES,
            ),
            **common,
        )(flat)
    else:
        # Extremely wide rows: tile both axes; keep the lane block a large
        # multiple of 128 so stores stay unmasked and lane-dense.
        block_rows = sub
        block_cols = max(128, (_MAX_BLOCK_BYTES // (block_rows * itemsize)) // 128 * 128)
        out = pl.pallas_call(
            _identity_kernel,
            grid=(pl.cdiv(rows, block_rows), pl.cdiv(cols, block_cols)),
            in_specs=[pl.BlockSpec((block_rows, block_cols), lambda i, j: (i, j))],
            out_specs=pl.BlockSpec((block_rows, block_cols), lambda i, j: (i, j)),
            compiler_params=pltpu.CompilerParams(
                dimension_semantics=("parallel", "parallel"),
                vmem_limit_bytes=_VMEM_LIMIT_BYTES,
            ),
            **common,
        )(flat)

    return out.reshape(orig_shape)


# TODO(synk): BaseModel.loss is abstract — no loss computation to translate.
# TODO(synk): BaseModel.process_batch is abstract (training loop / backprop glue) —
#             not a kernel-level concern.


if __name__ == "__main__":
    key = jax.random.PRNGKey(0)
    x_host = np.asarray(jax.random.normal(key, (2, 4, 16, 16), dtype=jnp.float32))  # NCHW
    x = jnp.asarray(x_host)

    # Donate the input so the aliased identity truly writes back in place.
    fwd = jax.jit(base_model_forward, donate_argnums=(0,))
    y = fwd(x)
    jax.block_until_ready(y)

    assert y.shape == x_host.shape and y.dtype == jnp.float32
    assert np.allclose(np.asarray(y), x_host)
    print("KERNEL_OK")
</pallas_src>

<mosaic_0001>
module attributes {stable_mosaic.version = 11 : i64} {
  func.func @_identity_kernel(%arg0: i32, %arg1: memref<2x1024xf32, #tpu.memory_space<vmem>>, %arg2: memref<2x1024xf32, #tpu.memory_space<vmem>>) attributes {dimension_semantics = [#tpu.dimension_semantics<arbitrary>], iteration_bounds = array<i64: 1>, scalar_prefetch = 0 : i64, scratch_operands = 0 : i64, tpu.core_type = #tpu.core_type<tc>, window_params = [{pipeline_mode = #tpu.pipeline_mode<synchronous>, transform_indices = @transform_0, window_bounds = array<i64: 2, 1024>}, {pipeline_mode = #tpu.pipeline_mode<synchronous>, transform_indices = @transform_1, window_bounds = array<i64: 2, 1024>}]} {
    %c0 = arith.constant 0 : index
    %c0_0 = arith.constant 0 : index
    %0 = vector.load %arg1[%c0, %c0_0] : memref<2x1024xf32, #tpu.memory_space<vmem>>, vector<2x1024xf32>
    %c0_1 = arith.constant 0 : index
    %c0_2 = arith.constant 0 : index
    %1 = vector.load %arg2[%c0_1, %c0_2] : memref<2x1024xf32, #tpu.memory_space<vmem>>, vector<2x1024xf32>
    tpu.vector_store %arg2[%c0_1, %c0_2], %0 {strides = array<i32>} : memref<2x1024xf32, #tpu.memory_space<vmem>>, vector<2x1024xf32>,
    return
  }
  func.func @transform_0(%arg0: i32) -> (i32, i32) {
    %c0_i32 = arith.constant 0 : i32
    %c0_i32_0 = arith.constant 0 : i32
    %c0_i32_1 = arith.constant 0 : i32
    return %c0_i32, %c0_i32_0 : i32, i32
  }
  func.func @transform_1(%arg0: i32) -> (i32, i32) {
    %c0_i32 = arith.constant 0 : i32
    %c0_i32_0 = arith.constant 0 : i32
    %c0_i32_1 = arith.constant 0 : i32
    return %c0_i32, %c0_i32_0 : i32, i32
  }
}

</mosaic_0001>

<llo_original>
// kernel: base_model_forward.1
$region0: #{base_model_forward.1}
  #allocation0 [shape = 'u32[]', space=smem, size = 0x4, offset = 0x4, fixed_abs, tag = 'smem constant byte address 0x4 - core index']
  #allocation1 [shape = 'u32[144,128]{1,0:T(1,128)}', space=vmem, size = 0x12000, scoped, tag = 'internal scratch']
  %s0 = inlined_call_operand.vmem [shape: f32[2,1024], index: 0, kind: input, shape index: {}, may-alias: {0,1}]
  %s1 = inlined_call_operand.vmem [shape: f32[2,1024], index: 1, kind: output, shape index: {}, may-alias: {0,1}]
  %s2 = sld [smem:[#allocation0]]
  $region14: #{base_model_forward.1} parent=0
    _
  %s4 = ssub.s32 1, %s2
  %s5 = scalar_select 0, %s4, %s2
  // Predicated region
  $region2: #{base_model_forward.1} parent=0 // pred_check
    _
  $region3: #{base_model_forward.1} parent=0 // pred_check_branch
    %7 = sbr.rel (0) target = $region5
  $region4: #{base_model_forward.1} parent=0 // pred_region
    _
  $region5: #{base_model_forward.1} parent=0 // pred_fallthru
    _
  %v8 = vld [vmem:[%s0] sm:$0xff]
  %v9 = vld [vmem:[%s0 + $0x8] sm:$0xff]
  %10 = vst [vmem:[%s1] sm:$0xff] %v8
  %11 = vst [vmem:[%s1 + $0x8] sm:$0xff] %v9
  // Predicated region
  $region6: #{base_model_forward.1} parent=0 // pred_check
    _
  $region7: #{base_model_forward.1} parent=0 // pred_check_branch
    %13 = sbr.rel (0) target = $region9
  $region8: #{base_model_forward.1} parent=0 // pred_region
    _
  $region9: #{base_model_forward.1} parent=0 // pred_fallthru
    _
  // Predicated region
  $region10: #{base_model_forward.1} parent=0 // pred_check
    _
  $region11: #{base_model_forward.1} parent=0 // pred_check_branch
    %15 = sbr.rel (0) target = $region13
  $region12: #{base_model_forward.1} parent=0 // pred_region
    _
  $region13: #{base_model_forward.1} parent=0 // pred_fallthru
    _

</llo_original>
